<compile_context>
chip_gen: v6e
topology: v6e:2x2x1
jax: 0.10.0
libtpu: 0.0.40
codegen_flags: <defaults>
</compile_context>

<pallas_src>
import jax
import jax.numpy as jnp
from jax import lax
from jax.experimental import pallas as pl
from jax.experimental.pallas import tpu as pltpu


def _round_up(x, m):
    return ((x + m - 1) // m) * m


def _vmem_budgets():
    """Generation-aware (scoped-VMEM limit, per-block byte budget)."""
    phys = 64 * 1024 * 1024                      # conservative fallback (v7x per-TC)
    try:
        info = pltpu.get_tpu_info()
        cap = getattr(info, "vmem_capacity_bytes", None)
        if cap:
            phys = int(cap)
    except Exception:
        pass
    # Leave at least half of physical VMEM for the compiler / other buffers,
    # never ask for more than 48 MiB scoped.
    vmem_limit = min(phys // 2, 48 * 1024 * 1024)
    # One big stream is double-buffered; ~limit/4 per block lands at
    # 8 MiB (v7x, 64 MiB phys) .. 12 MiB (v5e/v6e, 128 MiB phys).
    block_budget = vmem_limit // 4
    return vmem_limit, block_budget


# --------------------------- cross-entropy (mean) ----------------------------

def _make_ce_kernel(batch, num_classes, tb, tc):
    def kernel(labels_ref, logits_ref, out_ref, m_sc, s_sc, p_sc):
        i = pl.program_id(0)          # batch-tile index   ("parallel")
        c = pl.program_id(1)          # class-tile index   ("arbitrary", last)
        nc = pl.num_programs(1)

        @pl.when(c == 0)
        def _():
            m_sc[...] = jnp.full_like(m_sc, -jnp.inf)
            s_sc[...] = jnp.zeros_like(s_sc)
            p_sc[...] = jnp.zeros_like(p_sc)

        x = logits_ref[...].astype(jnp.float32)              # (tb, tc)
        lbl = labels_ref[...]                                 # (tb, 1) int32

        col = c * tc + lax.broadcasted_iota(jnp.int32, (tb, tc), 1)
        valid = col < num_classes
        x_m = jnp.where(valid, x, -jnp.inf)

        # Online (streamed) log-sum-exp over the class axis.
        m_prev = m_sc[...]
        m_new = jnp.maximum(m_prev, jnp.max(x_m, axis=-1, keepdims=True))
        s_sc[...] = (s_sc[...] * jnp.exp(m_prev - m_new)
                     + jnp.sum(jnp.exp(x_m - m_new), axis=-1, keepdims=True))
        # Label logit without a materialized one-hot. NOTE: labels are assumed
        # valid in [0, C); out-of-range labels silently contribute 0 here,
        # whereas torch.nn.CrossEntropyLoss would raise.
        p_sc[...] += jnp.sum(jnp.where((col == lbl) & valid, x, 0.0),
                             axis=-1, keepdims=True)
        m_sc[...] = m_new

        @pl.when(c == nc - 1)
        def _():
            row = i * tb + lax.broadcasted_iota(jnp.int32, (tb, 1), 0)
            lse = m_sc[...] + jnp.log(s_sc[...])
            per_row = jnp.where(row < batch, lse - p_sc[...], 0.0)  # mask pad rows
            partial = jnp.sum(per_row)
            # Lane-dense (1, 128) partial per B-tile (keeps axis 0 parallel-safe).
            lane = lax.broadcasted_iota(jnp.int32, (1, 128), 1)
            out_ref[...] = jnp.where(lane == 0, partial, 0.0)

    return kernel


def _cross_entropy_mean(logits, labels, *, vmem_limit, block_budget):
    """Mean softmax cross-entropy via a (B-tile, C-tile) Pallas grid."""
    B, C = logits.shape
    itemsize = jnp.dtype(logits.dtype).itemsize

    # Class tile: take the full class dim when even an 8-row block fits the
    # budget; otherwise tile it (online LSE across the class grid axis).
    if C * itemsize * 8 <= block_budget:
        tc = C
    else:
        tc = max(128, ((block_budget // (8 * itemsize)) // 128) * 128)
    ncl = pl.cdiv(C, tc)

    # Row tile: fill the byte budget (dtype-aware), 8-aligned, capped at 4096
    # (keeps the (tb, 1) f32 accumulator scratch small) and at the batch.
    tb = block_budget // max(tc * itemsize, 1)
    tb = max(8, min(4096, (tb // 8) * 8))
    tb = min(tb, _round_up(B, 8))
    if B > 8 and tb >= B:
        # Keep >= 2 row blocks so the parallel axis shards across v7x's 2 TCs.
        tb = max(8, _round_up((B + 1) // 2, 8))
    nb = pl.cdiv(B, tb)

    labels2d = labels.astype(jnp.int32).reshape(B, 1)

    partials = pl.pallas_call(
        _make_ce_kernel(B, C, tb, tc),
        grid=(nb, ncl),
        in_specs=[
            pl.BlockSpec((tb, 1), lambda i, c: (i, 0)),     # labels (tiny)
            pl.BlockSpec((tb, tc), lambda i, c: (i, c)),    # logits (native dtype)
        ],
        out_specs=pl.BlockSpec((1, 128), lambda i, c: (0, i)),
        out_shape=jax.ShapeDtypeStruct((1, nb * 128), jnp.float32),
        scratch_shapes=[pltpu.VMEM((tb, 1), jnp.float32)] * 3,  # m, s, picked
        compiler_params=pltpu.CompilerParams(
            dimension_semantics=("parallel", "arbitrary"),
            vmem_limit_bytes=int(vmem_limit)),
    )(labels2d, logits)
    # Tiny final reduction over nb lane-dense partials.
    return jnp.sum(partials) / B


# ------------------------- group lasso on head weight ------------------------

def _make_lasso_kernel(num_rows, num_cols, tc, td):
    def kernel(w_ref, out_ref, acc_sc):
        d = pl.program_id(0)          # column-tile index  ("parallel")
        c = pl.program_id(1)          # row-tile index     ("arbitrary", last)
        nc = pl.num_programs(1)

        @pl.when(c == 0)
        def _():
            acc_sc[...] = jnp.zeros_like(acc_sc)

        w = w_ref[...].astype(jnp.float32)                   # (tc, td)
        # Zero out padded rows/cols of edge blocks before squaring.
        row = c * tc + lax.broadcasted_iota(jnp.int32, (tc, 1), 0)
        col = d * td + lax.broadcasted_iota(jnp.int32, (1, td), 1)
        w = jnp.where((row < num_rows) & (col < num_cols), w, 0.0)

        # Per-column sum of squares, accumulated in VMEM (f32).
        acc_sc[...] += jnp.sum(w * w, axis=0, keepdims=True)  # (1, td)

        @pl.when(c == nc - 1)
        def _():
            # sqrt -> per-column L2 norm; sum -> this D-tile's L1 partial.
            # (padded columns give sqrt(0) = 0, so they don't contribute)
            partial = jnp.sum(jnp.sqrt(acc_sc[...]))
            lane = lax.broadcasted_iota(jnp.int32, (1, 128), 1)
            out_ref[...] = jnp.where(lane == 0, partial, 0.0)

    return kernel


def _group_lasso_norm(w, *, vmem_limit, block_budget):
    """|| per-column L2 of W=[C, D] ||_1 (inner_dim=0), tiled D x C grid."""
    C, D = w.shape
    itemsize = jnp.dtype(w.dtype).itemsize

    # Column (lane) tile: lane-dense, long contiguous DMA bursts; keep >= 2
    # column blocks when D allows so the parallel axis feeds both v7x cores.
    if D < 256:
        td = D
    else:
        td_budget = max(128, ((block_budget // (8 * itemsize)) // 128) * 128)
        td_budget = min(td_budget, 32768)
        td = min(td_budget, _round_up((D + 1) // 2, 128))
    nd = pl.cdiv(D, td)

    # Row (class/reduction) tile: fill the byte budget, 8-aligned.
    tc = block_budget // max(td * itemsize, 1)
    tc = max(8, (tc // 8) * 8)
    tc = min(tc, _round_up(C, 8))
    nc = pl.cdiv(C, tc)

    partials = pl.pallas_call(
        _make_lasso_kernel(C, D, tc, td),
        grid=(nd, nc),                                       # reduction axis last
        in_specs=[pl.BlockSpec((tc, td), lambda d, c: (c, d))],
        out_specs=pl.BlockSpec((1, 128), lambda d, c: (0, d)),
        out_shape=jax.ShapeDtypeStruct((1, nd * 128), jnp.float32),
        scratch_shapes=[pltpu.VMEM((1, td), jnp.float32)],
        compiler_params=pltpu.CompilerParams(
            dimension_semantics=("parallel", "arbitrary"),
            vmem_limit_bytes=int(vmem_limit)),
    )(w)
    # Tiny final reduction over nd lane-dense partials.
    return jnp.sum(partials)


# ------------------------------- public entry --------------------------------

def group_lasso_loss(logits, labels, head_weight, *, lasso_loss_weight=1e-4,
                     inner_dim=0):
    """Pallas-backed GroupLassoLoss forward.

    Args:
      logits:       [B, C] float — model outputs (native dtype, no pre-cast).
      labels:       [B]    int32 — class indices for cross-entropy.
      head_weight:  [C, D] float — model.head.weight (Linear layout).
    Returns:
      scalar float32 loss.
    """
    assert inner_dim == 0, "only inner_dim=0 implemented"
    vmem_limit, block_budget = _vmem_budgets()
    loss = _cross_entropy_mean(logits, labels,
                               vmem_limit=vmem_limit, block_budget=block_budget)
    if lasso_loss_weight > 0:
        loss = loss + jnp.float32(lasso_loss_weight) * _group_lasso_norm(
            head_weight, vmem_limit=vmem_limit, block_budget=block_budget)
    return loss


def _reference(logits, labels, head_weight, lasso_loss_weight):
    """Pure-JAX reference mirroring the PyTorch semantics."""
    logp = jax.nn.log_softmax(logits.astype(jnp.float32), axis=-1)
    ce = -jnp.mean(jnp.take_along_axis(logp, labels[:, None], axis=-1))
    lrp = jnp.sum(jnp.linalg.norm(head_weight.astype(jnp.float32), axis=0))
    return ce + lasso_loss_weight * lrp


if __name__ == "__main__":
    key = jax.random.PRNGKey(0)
    k1, k2, k3 = jax.random.split(key, 3)

    B, C, D = 8, 16, 32          # batch, num_classes, hidden dim
    lasso_loss_weight = 1e-2

    logits = jax.random.normal(k1, (B, C), dtype=jnp.float32)
    labels = jax.random.randint(k2, (B,), 0, C, dtype=jnp.int32)
    # Deterministic synthetic head weight (model.head.weight, shape [C, D]).
    head_weight = 0.02 * jax.random.normal(k3, (C, D), dtype=jnp.float32)

    loss = group_lasso_loss(logits, labels, head_weight,
                            lasso_loss_weight=lasso_loss_weight, inner_dim=0)
    loss = jax.block_until_ready(loss)

    ref = _reference(logits, labels, head_weight, lasso_loss_weight)
    assert jnp.allclose(loss, ref, rtol=1e-5, atol=1e-5), (loss, ref)

    print("KERNEL_OK")
</pallas_src>

<mosaic_0001>
module attributes {stable_mosaic.version = 11 : i64} {
  func.func @kernel(%arg0: i32, %arg1: i32, %arg2: memref<8x1xi32, #tpu.memory_space<vmem>>, %arg3: memref<8x16xf32, #tpu.memory_space<vmem>>, %arg4: memref<1x128xf32, #tpu.memory_space<vmem>>, %arg5: memref<8x1xf32, #tpu.memory_space<vmem>>, %arg6: memref<8x1xf32, #tpu.memory_space<vmem>>, %arg7: memref<8x1xf32, #tpu.memory_space<vmem>>) attributes {dimension_semantics = [#tpu.dimension_semantics<parallel>, #tpu.dimension_semantics<arbitrary>], iteration_bounds = array<i64: 1, 1>, scalar_prefetch = 0 : i64, scratch_operands = 3 : i64, tpu.core_type = #tpu.core_type<tc>, window_params = [{transform_indices = @transform_0, window_bounds = array<i64: 8, 1>}, {transform_indices = @transform_1, window_bounds = array<i64: 8, 16>}, {transform_indices = @transform_2, window_bounds = array<i64: 1, 128>}]} {
    %c0_i32 = arith.constant 0 : i32
    %0 = arith.cmpi eq, %arg1, %c0_i32 : i32
    %1 = arith.extui %0 : i1 to i32
    %c0_i32_0 = arith.constant 0 : i32
    %2 = arith.cmpi ne, %1, %c0_i32_0 : i32
    scf.if %2 {
      %cst_23 = arith.constant 0xFF800000 : f32
      %42 = vector.broadcast %cst_23 : f32 to vector<8x1xf32>
      %c0_24 = arith.constant 0 : index
      %c0_25 = arith.constant 0 : index
      %43 = vector.load %arg5[%c0_24, %c0_25] : memref<8x1xf32, #tpu.memory_space<vmem>>, vector<8x1xf32>
      tpu.vector_store %arg5[%c0_24, %c0_25], %42 {strides = array<i32>} : memref<8x1xf32, #tpu.memory_space<vmem>>, vector<8x1xf32>,
      %cst_26 = arith.constant 0.000000e+00 : f32
      %44 = vector.broadcast %cst_26 : f32 to vector<8x1xf32>
      %c0_27 = arith.constant 0 : index
      %c0_28 = arith.constant 0 : index
      %45 = vector.load %arg6[%c0_27, %c0_28] : memref<8x1xf32, #tpu.memory_space<vmem>>, vector<8x1xf32>
      tpu.vector_store %arg6[%c0_27, %c0_28], %44 {strides = array<i32>} : memref<8x1xf32, #tpu.memory_space<vmem>>, vector<8x1xf32>,
      %cst_29 = arith.constant 0.000000e+00 : f32
      %46 = vector.broadcast %cst_29 : f32 to vector<8x1xf32>
      %c0_30 = arith.constant 0 : index
      %c0_31 = arith.constant 0 : index
      %47 = vector.load %arg7[%c0_30, %c0_31] : memref<8x1xf32, #tpu.memory_space<vmem>>, vector<8x1xf32>
      tpu.vector_store %arg7[%c0_30, %c0_31], %46 {strides = array<i32>} : memref<8x1xf32, #tpu.memory_space<vmem>>, vector<8x1xf32>,
    } else {
    }
    %c0 = arith.constant 0 : index
    %c0_1 = arith.constant 0 : index
    %3 = vector.load %arg3[%c0, %c0_1] : memref<8x16xf32, #tpu.memory_space<vmem>>, vector<8x16xf32>
    %c0_2 = arith.constant 0 : index
    %c0_3 = arith.constant 0 : index
    %4 = vector.load %arg2[%c0_2, %c0_3] : memref<8x1xi32, #tpu.memory_space<vmem>>, vector<8x1xi32>
    %c16_i32 = arith.constant 16 : i32
    %5 = arith.muli %arg1, %c16_i32 : i32
    %6 = tpu.iota {dimensions = array<i32: 1>} : vector<8x16xi32>
    %7 = vector.broadcast %5 : i32 to vector<8x16xi32>
    %8 = arith.addi %7, %6 : vector<8x16xi32>
    %c16_i32_4 = arith.constant 16 : i32
    %9 = vector.broadcast %c16_i32_4 : i32 to vector<8x16xi32>
    %10 = arith.cmpi slt, %8, %9 : vector<8x16xi32>
    %cst = arith.constant 0xFF800000 : f32
    %11 = vector.broadcast %cst : f32 to vector<8x16xf32>
    %12 = arith.select %10, %3, %11 : vector<8x16xi1>, vector<8x16xf32>
    %c0_5 = arith.constant 0 : index
    %c0_6 = arith.constant 0 : index
    %13 = vector.load %arg5[%c0_5, %c0_6] : memref<8x1xf32, #tpu.memory_space<vmem>>, vector<8x1xf32>
    %cst_7 = arith.constant dense<0xFF800000> : vector<8xf32>
    %14 = vector.multi_reduction <maximumf>, %12, %cst_7 [1] : vector<8x16xf32> to vector<8xf32>
    %15 = vector.shape_cast %14 : vector<8xf32> to vector<8x1xf32>
    %16 = arith.maximumf %13, %15 : vector<8x1xf32>
    %c0_8 = arith.constant 0 : index
    %c0_9 = arith.constant 0 : index
    %17 = vector.load %arg6[%c0_8, %c0_9] : memref<8x1xf32, #tpu.memory_space<vmem>>, vector<8x1xf32>
    %18 = arith.subf %13, %16 : vector<8x1xf32>
    %19 = math.exp %18 : vector<8x1xf32>
    %20 = arith.mulf %17, %19 : vector<8x1xf32>
    %21 = vector.broadcast %16 : vector<8x1xf32> to vector<8x16xf32>
    %22 = arith.subf %12, %21 : vector<8x16xf32>
    %23 = math.exp %22 : vector<8x16xf32>
    %cst_10 = arith.constant dense<0.000000e+00> : vector<8xf32>
    %24 = vector.multi_reduction <add>, %23, %cst_10 [1] : vector<8x16xf32> to vector<8xf32>
    %25 = vector.shape_cast %24 : vector<8xf32> to vector<8x1xf32>
    %26 = arith.addf %20, %25 : vector<8x1xf32>
    %c0_11 = arith.constant 0 : index
    %c0_12 = arith.constant 0 : index
    %27 = vector.load %arg6[%c0_11, %c0_12] : memref<8x1xf32, #tpu.memory_space<vmem>>, vector<8x1xf32>
    tpu.vector_store %arg6[%c0_11, %c0_12], %26 {strides = array<i32>} : memref<8x1xf32, #tpu.memory_space<vmem>>, vector<8x1xf32>,
    %c0_13 = arith.constant 0 : index
    %c0_14 = arith.constant 0 : index
    %28 = vector.load %arg7[%c0_13, %c0_14] : memref<8x1xf32, #tpu.memory_space<vmem>>, vector<8x1xf32>
    %29 = vector.broadcast %4 : vector<8x1xi32> to vector<8x16xi32>
    %30 = arith.cmpi eq, %8, %29 : vector<8x16xi32>
    %31 = arith.andi %30, %10 : vector<8x16xi1>
    %cst_15 = arith.constant 0.000000e+00 : f32
    %32 = vector.broadcast %cst_15 : f32 to vector<8x16xf32>
    %33 = arith.select %31, %3, %32 : vector<8x16xi1>, vector<8x16xf32>
    %cst_16 = arith.constant dense<0.000000e+00> : vector<8xf32>
    %34 = vector.multi_reduction <add>, %33, %cst_16 [1] : vector<8x16xf32> to vector<8xf32>
    %35 = vector.shape_cast %34 : vector<8xf32> to vector<8x1xf32>
    %36 = arith.addf %28, %35 : vector<8x1xf32>
    %c0_17 = arith.constant 0 : index
    %c0_18 = arith.constant 0 : index
    %37 = vector.load %arg7[%c0_17, %c0_18] : memref<8x1xf32, #tpu.memory_space<vmem>>, vector<8x1xf32>
    tpu.vector_store %arg7[%c0_17, %c0_18], %36 {strides = array<i32>} : memref<8x1xf32, #tpu.memory_space<vmem>>, vector<8x1xf32>,
    %c0_19 = arith.constant 0 : index
    %c0_20 = arith.constant 0 : index
    %38 = vector.load %arg5[%c0_19, %c0_20] : memref<8x1xf32, #tpu.memory_space<vmem>>, vector<8x1xf32>
    tpu.vector_store %arg5[%c0_19, %c0_20], %16 {strides = array<i32>} : memref<8x1xf32, #tpu.memory_space<vmem>>, vector<8x1xf32>,
    %c0_i32_21 = arith.constant 0 : i32
    %39 = arith.cmpi eq, %arg1, %c0_i32_21 : i32
    %40 = arith.extui %39 : i1 to i32
    %c0_i32_22 = arith.constant 0 : i32
    %41 = arith.cmpi ne, %40, %c0_i32_22 : i32
    scf.if %41 {
      %c8_i32 = arith.constant 8 : i32
      %42 = arith.muli %arg0, %c8_i32 : i32
      %43 = tpu.iota {dimensions = array<i32: 0>} : vector<8x1xi32>
      %44 = vector.broadcast %42 : i32 to vector<8x1xi32>
      %45 = arith.addi %44, %43 : vector<8x1xi32>
      %c0_23 = arith.constant 0 : index
      %c0_24 = arith.constant 0 : index
      %46 = vector.load %arg5[%c0_23, %c0_24] : memref<8x1xf32, #tpu.memory_space<vmem>>, vector<8x1xf32>
      %c0_25 = arith.constant 0 : index
      %c0_26 = arith.constant 0 : index
      %47 = vector.load %arg6[%c0_25, %c0_26] : memref<8x1xf32, #tpu.memory_space<vmem>>, vector<8x1xf32>
      %48 = math.log %47 : vector<8x1xf32>
      %49 = arith.addf %46, %48 : vector<8x1xf32>
      %c8_i32_27 = arith.constant 8 : i32
      %50 = vector.broadcast %c8_i32_27 : i32 to vector<8x1xi32>
      %51 = arith.cmpi slt, %45, %50 : vector<8x1xi32>
      %c0_28 = arith.constant 0 : index
      %c0_29 = arith.constant 0 : index
      %52 = vector.load %arg7[%c0_28, %c0_29] : memref<8x1xf32, #tpu.memory_space<vmem>>, vector<8x1xf32>
      %53 = arith.subf %49, %52 : vector<8x1xf32>
      %cst_30 = arith.constant 0.000000e+00 : f32
      %54 = vector.broadcast %cst_30 : f32 to vector<8x1xf32>
      %55 = arith.select %51, %53, %54 : vector<8x1xi1>, vector<8x1xf32>
      %56 = vector.shape_cast %55 : vector<8x1xf32> to vector<1x8x1xf32>
      %cst_31 = arith.constant dense<0.000000e+00> : vector<1xf32>
      %57 = vector.multi_reduction <add>, %56, %cst_31 [1, 2] : vector<1x8x1xf32> to vector<1xf32>
      %58 = vector.shape_cast %57 : vector<1xf32> to vector<1x1x1xf32>
      %59 = vector.extract %58[0, 0, 0] : f32 from vector<1x1x1xf32>
      %60 = tpu.iota {dimensions = array<i32: 1>} : vector<1x128xi32>
      %c0_i32_32 = arith.constant 0 : i32
      %61 = vector.broadcast %c0_i32_32 : i32 to vector<1x128xi32>
      %62 = arith.cmpi eq, %60, %61 : vector<1x128xi32>
      %cst_33 = arith.constant 0.000000e+00 : f32
      %63 = vector.broadcast %59 : f32 to vector<1x128xf32>
      %64 = vector.broadcast %cst_33 : f32 to vector<1x128xf32>
      %65 = arith.select %62, %63, %64 : vector<1x128xi1>, vector<1x128xf32>
      %c0_34 = arith.constant 0 : index
      %c0_35 = arith.constant 0 : index
      %66 = vector.load %arg4[%c0_34, %c0_35] : memref<1x128xf32, #tpu.memory_space<vmem>>, vector<1x128xf32>
      tpu.vector_store %arg4[%c0_34, %c0_35], %65 {strides = array<i32>} : memref<1x128xf32, #tpu.memory_space<vmem>>, vector<1x128xf32>,
    } else {
    }
    return
  }
  func.func @transform_0(%arg0: i32, %arg1: i32) -> (i32, i32) {
    %c0_i32 = arith.constant 0 : i32
    %c0_i32_0 = arith.constant 0 : i32
    return %arg0, %c0_i32 : i32, i32
  }
  func.func @transform_1(%arg0: i32, %arg1: i32) -> (i32, i32) {
    %c0_i32 = arith.constant 0 : i32
    return %arg0, %arg1 : i32, i32
  }
  func.func @transform_2(%arg0: i32, %arg1: i32) -> (i32, i32) {
    %c0_i32 = arith.constant 0 : i32
    %c0_i32_0 = arith.constant 0 : i32
    return %c0_i32, %arg0 : i32, i32
  }
}

</mosaic_0001>

<llo_original>
// kernel: tpu_custom_call.1
$region0: #{tpu_custom_call.1}
  #allocation0 [shape = 'u32[]', space=smem, size = 0x4, offset = 0x4, fixed_abs, tag = 'smem constant byte address 0x4 - core index']
  #allocation1 [shape = 'u32[144,128]{1,0:T(1,128)}', space=vmem, size = 0x12000, scoped, tag = 'internal scratch']
  #allocation2 [shape = 'f32[8,1]{1,0:T(8,128)}', space=vmem, size = 0x1000, scoped, tag = 'scratch operand']
  #allocation3 [shape = 'f32[8,1]{1,0:T(8,128)}', space=vmem, size = 0x1000, scoped, tag = 'scratch operand']
  #allocation4 [shape = 'f32[8,1]{1,0:T(8,128)}', space=vmem, size = 0x1000, scoped, tag = 'scratch operand']
  %s0 = inlined_call_operand.vmem [shape: s32[8,1], index: 0, kind: input, shape index: {}]
  %s1 = inlined_call_operand.vmem [shape: f32[8,16], index: 1, kind: input, shape index: {}]
  %s2 = inlined_call_operand.hbm [shape: f32[1,128], index: 2, kind: output, shape index: {}]
  %s3 = sld [smem:[#allocation0]]
  $region26: #{tpu_custom_call.1} parent=0
    _
  %s5 = ssub.s32 1, %s3
  %s6 = scalar_select 0, %s5, %s3
  $region1: #{tpu_custom_call.1} parent=0
    #allocation5 [shape = 'u8[512]{0}', space=vmem, size = 0x400, scoped, tag = 'output window, operand 0, single buffered']
    #allocation6 [shape = 's32[1]{0}', space=sflag, size = 0x4, scoped, tag = 'scoped memory for tpu_custom_call.1']
    %7 = vsyncpa [#allocation6], 0
    // Predicated region
    $region2: #{tpu_custom_call.1} parent=1 // pred_check
      _
    $region3: #{tpu_custom_call.1} parent=1 // pred_check_branch
      %9 = sbr.rel (0) target = $region5
    $region4: #{tpu_custom_call.1} parent=1 // pred_region
      _
    $region5: #{tpu_custom_call.1} parent=1 // pred_fallthru
      _
    // Predicated region
    $region6: #{tpu_custom_call.1} parent=1 // pred_check
      _
    $region7: #{tpu_custom_call.1} parent=1 // pred_check_branch
      %11 = sbr.rel (0) target = $region9
    $region8: #{tpu_custom_call.1} parent=1 // pred_region
      _
    $region9: #{tpu_custom_call.1} parent=1 // pred_fallthru
      _
    %p12 = scmp.eq.s32.totalorder 0, 0
    // Predicated region
    $region10: #{tpu_custom_call.1} parent=1 // pred_check
      %p13 = pneg %p12
    $region11: #{tpu_custom_call.1} parent=1 // pred_check_branch
      %15 = sbr.rel (%p13) target = $region13
    $region12: #{tpu_custom_call.1} parent=1 // pred_region
      %vm16 = vcmask 7168
      %17 = vst.msk [vmem:[#allocation2] sm:$0xff] %vm16, -inf
      %18 = vst.msk [vmem:[#allocation3] sm:$0xff] %vm16, 0.0
      %19 = vst.msk [vmem:[#allocation4] sm:$0xff] %vm16, 0.0
    $region13: #{tpu_custom_call.1} parent=1 // pred_fallthru
      _
    %v20 = vld [vmem:[%s1] sm:$0xff]
    %v21 = vld [vmem:[%s0] sm:$0xff]
    %s22 = smul.u32 0, 16
    %v23 = vlaneseq
    %v24 = vand.u32 %v23, 127
    %v25 = vstv %s22
    %v26 = vadd.s32 %v25, %v24
    %vm27 = vcmp.lt.s32.totalorder %v26, 16
    %v28 = vsel %vm27, %v20, -inf
    %v29 = vld [vmem:[#allocation2] sm:$0xff]
    %vm30 = vcmask 130048
    %v31 = vsel %vm30, %v28, -inf
    %32 = vmax.xlane.f32.xlu0 %v31
    %v33 = vpop.xlane.xlu0 %32
    %v34 = vmax.f32 %v29, %v33
    %v35 = vld [vmem:[#allocation3] sm:$0xff]
    %v36 = vsub.f32 %v29, %v34
    %v37 = vmul.f32 %v36, 1.442695
    %v38 = vpow.pop %v37
    %v39 = vmul.f32 %v35, %v38
    %41 = vset.pattern.permute.xlu0 0
    %42 = vperm.xlu0 %41, %v34
    %v43 = vpop.permute.xlu0 %42
    %v45 = vsub.f32 %v28, %v43
    %v46 = vmul.f32 %v45, 1.442695
    %v47 = vpow.pop %v46
    %v48 = vsel %vm30, %v47, 0.0
    %49 = vadd.xlane.f32.xlu0 %v48
    %v50 = vpop.xlane.xlu0 %49
    %v51 = vadd.f32 %v39, %v50
    %vm52 = vcmask 7168
    %53 = vst.msk [vmem:[#allocation3] sm:$0xff] %vm52, %v51
    %v54 = vld [vmem:[#allocation4] sm:$0xff]
    %55 = vset.pattern.permute.xlu0 0
    %56 = vperm.xlu0 %55, %v21
    %v57 = vpop.permute.xlu0 %56
    %vm58 = vcmp.eq.s32.totalorder %v26, %v57
    %vm59 = vmand %vm58, %vm27
    %v60 = vsel %vm59, %v20, 0.0
    %v61 = vsel %vm30, %v60, 0.0
    %62 = vadd.xlane.f32.xlu0 %v61
    %v63 = vpop.xlane.xlu0 %62
    %v64 = vadd.f32 %v54, %v63
    %65 = vst.msk [vmem:[#allocation4] sm:$0xff] %vm52, %v64
    %66 = vst.msk [vmem:[#allocation2] sm:$0xff] %vm52, %v34
    // Predicated region
    $region14: #{tpu_custom_call.1} parent=1 // pred_check
      %p67 = pneg %p12
    $region15: #{tpu_custom_call.1} parent=1 // pred_check_branch
      %69 = sbr.rel (%p67) target = $region17
    $region16: #{tpu_custom_call.1} parent=1 // pred_region
      %s70 = smul.u32 0, 8
      %v71 = vlaneseq
      %v72 = vshrl.u32 %v71, 7
      %v73 = vstv %s70
      %v74 = vadd.s32 %v73, %v72
      %v75 = vld [vmem:[#allocation2] sm:$0xff]
      %v76 = vld [vmem:[#allocation3] sm:$0xff]
      %v77 = vlog2.pop %v76
      %v78 = vmul.f32 %v77, 0.6931472
      %v79 = vadd.f32 %v75, %v78
      %vm80 = vcmp.lt.s32.totalorder %v74, 8
      %v81 = vld [vmem:[#allocation4] sm:$0xff]
      %v82 = vsub.f32 %v79, %v81
      %v83 = vsel %vm80, %v82, 0.0
      %v84 = vsel %vm52, %v83, 0.0
      %85 = vadd.xlane.f32.xlu0 %v84
      %v86 = vpop.xlane.xlu0 %85
      %v87 = vrot.slane %v86, 4
      %v88 = vadd.f32 %v86, %v87
      %v89 = vrot.slane %v88, 2
      %v90 = vadd.f32 %v88, %v89
      %v91 = vrot.slane %v90, 1
      %v92 = vadd.f32 %v90, %v91
      %s93 = vtos %v92
      %vm94 = vcmp.eq.s32.totalorder %v24, 0
      %v95 = vstv %s93
      %v96 = vsel %vm94, %v95, 0.0
      %97 = vst [vmem:[#allocation5] sm:$0x1] %v96
    $region17: #{tpu_custom_call.1} parent=1 // pred_fallthru
      _
    // Predicated region
    $region18: #{tpu_custom_call.1} parent=1 // pred_check
      _
    $region19: #{tpu_custom_call.1} parent=1 // pred_check_branch
      %99 = sbr.rel (0) target = $region21
    $region20: #{tpu_custom_call.1} parent=1 // pred_region
      %s101 = ssub.s32 16, 16
      %102 = vsyncadd [#allocation6], %s101
      %s104 = sshll.u32 [#allocation5], 4
      %s105 = int_to_ptr.vmem [resolvable:$true] %s104
      %107 = dma.vmem_to_hbm [thread:$0]  %s105, 16, %s2, [#allocation6]
    $region21: #{tpu_custom_call.1} parent=1 // pred_fallthru
      _
    // Predicated region
    $region22: #{tpu_custom_call.1} parent=1 // pred_check
      _
    $region23: #{tpu_custom_call.1} parent=1 // pred_check_branch
      %109 = sbr.rel (0) target = $region25
    $region24: #{tpu_custom_call.1} parent=1 // pred_region
      %110 = dma.done [#allocation6], 16
    $region25: #{tpu_custom_call.1} parent=1 // pred_fallthru
      _
    %111 = vsyncpa [#allocation6], 1

</llo_original>
